<compile_context>
chip_gen: v6e
topology: v6e:2x2x1
jax: 0.10.0
libtpu: 0.0.40
codegen_flags: <defaults>
</compile_context>

<pallas_src>
import jax
import jax.numpy as jnp
from jax.experimental import pallas as pl
from jax.experimental.pallas import tpu as pltpu

# --- problem sizes (from the PyTorch module) -------------------------------
N, CIN, H, W = 1, 1, 4, 4
COUT, K = 3, 3
STRIDE, PAD, OUT_PAD = 1, 1, 1
assert STRIDE == 1  # padding/output-size formulas below require stride == 1

PAD_LO = K - 1 - PAD                    # 1  (top / left)
PAD_HI = K - 1 - PAD + OUT_PAD          # 2  (bottom / right)
HO = (H - 1) * STRIDE - 2 * PAD + K + OUT_PAD   # 5
WO = (W - 1) * STRIDE - 2 * PAD + K + OUT_PAD   # 5

P = HO * WO          # 25 output positions per (batch, channel)
PPAD = 128           # lane-dense padding of the output-position axis
CKK = CIN * K * K    # 9 taps


def _convt_relu_kernel(wb_ref, bb_ref, p_ref, o_ref):
    # wb_ref: VMEM (COUT*CKK, PPAD) f32 -- flipped weights, lane-broadcast
    # bb_ref: VMEM (COUT, PPAD)     f32 -- bias, lane-broadcast
    # p_ref : VMEM (CKK, PPAD)      f32 -- lane-dense im2col patches (this batch)
    # o_ref : VMEM (COUT, PPAD)     f32 -- lane-dense output slab (this batch)
    #
    # Hoist the 9 patch rows once and reuse them across output channels.
    p_rows = [p_ref[k, :] for k in range(CKK)]
    for co in range(COUT):
        acc = bb_ref[co, :]
        for k in range(CKK):
            acc = acc + wb_ref[co * CKK + k, :] * p_rows[k]
        # Fused ReLU (Model.forward applies torch.relu to the conv output).
        o_ref[co, :] = jnp.maximum(acc, 0.0)


def model_forward(x, weight, bias):
    """x: (N, CIN, H, W); weight: (CIN, COUT, K, K) PyTorch layout; bias: (COUT,)."""
    n = x.shape[0]
    x = x.astype(jnp.float32)

    # --- layout plumbing (tiny tensors; fuses into one small XLA op) --------
    # im2col: for tap k = ci*K*K + kh*K + kw and flattened output position
    # p = oh*WO + ow, patches[n, k, p] = xpad[n, ci, oh+kh, ow+kw].
    xpad = jnp.pad(x, ((0, 0), (0, 0), (PAD_LO, PAD_HI), (PAD_LO, PAD_HI)))
    taps = [xpad[:, :, kh:kh + HO, kw:kw + WO] for kh in range(K) for kw in range(K)]
    patches = jnp.stack(taps, axis=2).reshape(n, CKK, P)          # (N, CKK, 25)
    patches = jnp.pad(patches, ((0, 0), (0, 0), (0, PPAD - P)))   # lane-pad -> 128

    # Spatially flipped weights, flattened to (COUT*CKK,), lane-broadcast to 128.
    w_flip = weight[:, :, ::-1, ::-1].astype(jnp.float32)         # (CIN, COUT, K, K)
    w_rows = jnp.transpose(w_flip, (1, 0, 2, 3)).reshape(COUT * CKK, 1)
    wb = jnp.broadcast_to(w_rows, (COUT * CKK, PPAD))
    bb = jnp.broadcast_to(bias.astype(jnp.float32)[:, None], (COUT, PPAD))

    slab = pl.pallas_call(
        _convt_relu_kernel,
        out_shape=jax.ShapeDtypeStruct((n, COUT, PPAD), jnp.float32),
        grid_spec=pltpu.PrefetchScalarGridSpec(
            num_scalar_prefetch=0,
            grid=(n,),
            in_specs=[
                pl.BlockSpec((COUT * CKK, PPAD), lambda b: (0, 0)),    # weights
                pl.BlockSpec((COUT, PPAD), lambda b: (0, 0)),          # bias
                pl.BlockSpec((None, CKK, PPAD), lambda b: (b, 0, 0)),  # patches
            ],
            out_specs=pl.BlockSpec((None, COUT, PPAD), lambda b: (b, 0, 0)),
        ),
        compiler_params=pltpu.CompilerParams(
            # Batch iterations are independent -> shard across TCs on v7x;
            # neutral on v5e/v6e (single TensorCore).
            dimension_semantics=("parallel",),
        ),
    )(wb, bb, patches)

    # Strip lane padding and restore NCHW (pure layout plumbing in XLA).
    return slab[:, :, :P].reshape(n, COUT, HO, WO)


if __name__ == "__main__":
    key = jax.random.PRNGKey(0)
    kx, kw, kb = jax.random.split(key, 3)

    # Shapes implied by the PyTorch module: x1 = randn(1, 1, 4, 4);
    # ConvTranspose2d weight layout is (in_channels, out_channels, kH, kW).
    x1 = jax.random.normal(kx, (N, CIN, H, W), dtype=jnp.float32)
    weight = jax.random.normal(kw, (CIN, COUT, K, K), dtype=jnp.float32) * 0.1
    bias = jax.random.normal(kb, (COUT,), dtype=jnp.float32) * 0.1

    out = model_forward(x1, weight, bias)
    out = jax.block_until_ready(out)

    # Plain-JAX reference of the same transposed-conv + ReLU math.
    x_pad = jnp.pad(x1, ((0, 0), (0, 0), (PAD_LO, PAD_HI), (PAD_LO, PAD_HI)))
    w_flip = weight[:, :, ::-1, ::-1]
    pat = jnp.stack(
        [x_pad[:, :, kh:kh + HO, kw:kw + WO] for kh in range(K) for kw in range(K)],
        axis=2,
    )  # (N, CIN, K*K, HO, WO)
    ref = jnp.einsum("ncksq,cok->nosq", pat, w_flip.reshape(CIN, COUT, K * K))
    ref = ref + bias[None, :, None, None]
    ref = jnp.maximum(ref, 0.0)  # torch.relu in Model.forward

    assert out.shape == (N, COUT, HO, WO), out.shape
    assert jnp.allclose(out, ref, atol=1e-5, rtol=1e-5)
    print("KERNEL_OK")
</pallas_src>

<mosaic_0001>
module attributes {stable_mosaic.version = 11 : i64} {
  func.func @_convt_relu_kernel(%arg0: i32, %arg1: memref<27x128xf32, #tpu.memory_space<vmem>>, %arg2: memref<3x128xf32, #tpu.memory_space<vmem>>, %arg3: memref<1x9x128xf32, #tpu.memory_space<vmem>>, %arg4: memref<1x3x128xf32, #tpu.memory_space<vmem>>) attributes {dimension_semantics = [#tpu.dimension_semantics<parallel>], iteration_bounds = array<i64: 1>, scalar_prefetch = 0 : i64, scratch_operands = 0 : i64, tpu.core_type = #tpu.core_type<tc>, window_params = [{pipeline_mode = #tpu.pipeline_mode<synchronous>, transform_indices = @transform_0, window_bounds = array<i64: 27, 128>}, {pipeline_mode = #tpu.pipeline_mode<synchronous>, transform_indices = @transform_1, window_bounds = array<i64: 3, 128>}, {transform_indices = @transform_2, window_bounds = array<i64: 1, 9, 128>}, {transform_indices = @transform_3, window_bounds = array<i64: 1, 3, 128>}]} {
    %c0 = arith.constant 0 : index
    %c0_0 = arith.constant 0 : index
    %c0_1 = arith.constant 0 : index
    %0 = vector.load %arg3[%c0, %c0_0, %c0_1] : memref<1x9x128xf32, #tpu.memory_space<vmem>>, vector<1x1x128xf32>
    %1 = vector.shape_cast %0 : vector<1x1x128xf32> to vector<128xf32>
    %c0_2 = arith.constant 0 : index
    %c1 = arith.constant 1 : index
    %c0_3 = arith.constant 0 : index
    %2 = vector.load %arg3[%c0_2, %c1, %c0_3] : memref<1x9x128xf32, #tpu.memory_space<vmem>>, vector<1x1x128xf32>
    %3 = vector.shape_cast %2 : vector<1x1x128xf32> to vector<128xf32>
    %c0_4 = arith.constant 0 : index
    %c2 = arith.constant 2 : index
    %c0_5 = arith.constant 0 : index
    %4 = vector.load %arg3[%c0_4, %c2, %c0_5] : memref<1x9x128xf32, #tpu.memory_space<vmem>>, vector<1x1x128xf32>
    %5 = vector.shape_cast %4 : vector<1x1x128xf32> to vector<128xf32>
    %c0_6 = arith.constant 0 : index
    %c3 = arith.constant 3 : index
    %c0_7 = arith.constant 0 : index
    %6 = vector.load %arg3[%c0_6, %c3, %c0_7] : memref<1x9x128xf32, #tpu.memory_space<vmem>>, vector<1x1x128xf32>
    %7 = vector.shape_cast %6 : vector<1x1x128xf32> to vector<128xf32>
    %c0_8 = arith.constant 0 : index
    %c4 = arith.constant 4 : index
    %c0_9 = arith.constant 0 : index
    %8 = vector.load %arg3[%c0_8, %c4, %c0_9] : memref<1x9x128xf32, #tpu.memory_space<vmem>>, vector<1x1x128xf32>
    %9 = vector.shape_cast %8 : vector<1x1x128xf32> to vector<128xf32>
    %c0_10 = arith.constant 0 : index
    %c5 = arith.constant 5 : index
    %c0_11 = arith.constant 0 : index
    %10 = vector.load %arg3[%c0_10, %c5, %c0_11] : memref<1x9x128xf32, #tpu.memory_space<vmem>>, vector<1x1x128xf32>
    %11 = vector.shape_cast %10 : vector<1x1x128xf32> to vector<128xf32>
    %c0_12 = arith.constant 0 : index
    %c6 = arith.constant 6 : index
    %c0_13 = arith.constant 0 : index
    %12 = vector.load %arg3[%c0_12, %c6, %c0_13] : memref<1x9x128xf32, #tpu.memory_space<vmem>>, vector<1x1x128xf32>
    %13 = vector.shape_cast %12 : vector<1x1x128xf32> to vector<128xf32>
    %c0_14 = arith.constant 0 : index
    %c7 = arith.constant 7 : index
    %c0_15 = arith.constant 0 : index
    %14 = vector.load %arg3[%c0_14, %c7, %c0_15] : memref<1x9x128xf32, #tpu.memory_space<vmem>>, vector<1x1x128xf32>
    %15 = vector.shape_cast %14 : vector<1x1x128xf32> to vector<128xf32>
    %c0_16 = arith.constant 0 : index
    %c8 = arith.constant 8 : index
    %c0_17 = arith.constant 0 : index
    %16 = vector.load %arg3[%c0_16, %c8, %c0_17] : memref<1x9x128xf32, #tpu.memory_space<vmem>>, vector<1x1x128xf32>
    %17 = vector.shape_cast %16 : vector<1x1x128xf32> to vector<128xf32>
    %c0_18 = arith.constant 0 : index
    %c0_19 = arith.constant 0 : index
    %18 = vector.load %arg2[%c0_18, %c0_19] : memref<3x128xf32, #tpu.memory_space<vmem>>, vector<1x128xf32>
    %19 = vector.shape_cast %18 : vector<1x128xf32> to vector<128xf32>
    %c0_20 = arith.constant 0 : index
    %c0_21 = arith.constant 0 : index
    %20 = vector.load %arg1[%c0_20, %c0_21] : memref<27x128xf32, #tpu.memory_space<vmem>>, vector<1x128xf32>
    %21 = vector.shape_cast %20 : vector<1x128xf32> to vector<128xf32>
    %22 = arith.mulf %21, %1 : vector<128xf32>
    %23 = arith.addf %19, %22 : vector<128xf32>
    %c1_22 = arith.constant 1 : index
    %c0_23 = arith.constant 0 : index
    %24 = vector.load %arg1[%c1_22, %c0_23] : memref<27x128xf32, #tpu.memory_space<vmem>>, vector<1x128xf32>
    %25 = vector.shape_cast %24 : vector<1x128xf32> to vector<128xf32>
    %26 = arith.mulf %25, %3 : vector<128xf32>
    %27 = arith.addf %23, %26 : vector<128xf32>
    %c2_24 = arith.constant 2 : index
    %c0_25 = arith.constant 0 : index
    %28 = vector.load %arg1[%c2_24, %c0_25] : memref<27x128xf32, #tpu.memory_space<vmem>>, vector<1x128xf32>
    %29 = vector.shape_cast %28 : vector<1x128xf32> to vector<128xf32>
    %30 = arith.mulf %29, %5 : vector<128xf32>
    %31 = arith.addf %27, %30 : vector<128xf32>
    %c3_26 = arith.constant 3 : index
    %c0_27 = arith.constant 0 : index
    %32 = vector.load %arg1[%c3_26, %c0_27] : memref<27x128xf32, #tpu.memory_space<vmem>>, vector<1x128xf32>
    %33 = vector.shape_cast %32 : vector<1x128xf32> to vector<128xf32>
    %34 = arith.mulf %33, %7 : vector<128xf32>
    %35 = arith.addf %31, %34 : vector<128xf32>
    %c4_28 = arith.constant 4 : index
    %c0_29 = arith.constant 0 : index
    %36 = vector.load %arg1[%c4_28, %c0_29] : memref<27x128xf32, #tpu.memory_space<vmem>>, vector<1x128xf32>
    %37 = vector.shape_cast %36 : vector<1x128xf32> to vector<128xf32>
    %38 = arith.mulf %37, %9 : vector<128xf32>
    %39 = arith.addf %35, %38 : vector<128xf32>
    %c5_30 = arith.constant 5 : index
    %c0_31 = arith.constant 0 : index
    %40 = vector.load %arg1[%c5_30, %c0_31] : memref<27x128xf32, #tpu.memory_space<vmem>>, vector<1x128xf32>
    %41 = vector.shape_cast %40 : vector<1x128xf32> to vector<128xf32>
    %42 = arith.mulf %41, %11 : vector<128xf32>
    %43 = arith.addf %39, %42 : vector<128xf32>
    %c6_32 = arith.constant 6 : index
    %c0_33 = arith.constant 0 : index
    %44 = vector.load %arg1[%c6_32, %c0_33] : memref<27x128xf32, #tpu.memory_space<vmem>>, vector<1x128xf32>
    %45 = vector.shape_cast %44 : vector<1x128xf32> to vector<128xf32>
    %46 = arith.mulf %45, %13 : vector<128xf32>
    %47 = arith.addf %43, %46 : vector<128xf32>
    %c7_34 = arith.constant 7 : index
    %c0_35 = arith.constant 0 : index
    %48 = vector.load %arg1[%c7_34, %c0_35] : memref<27x128xf32, #tpu.memory_space<vmem>>, vector<1x128xf32>
    %49 = vector.shape_cast %48 : vector<1x128xf32> to vector<128xf32>
    %50 = arith.mulf %49, %15 : vector<128xf32>
    %51 = arith.addf %47, %50 : vector<128xf32>
    %c8_36 = arith.constant 8 : index
    %c0_37 = arith.constant 0 : index
    %52 = vector.load %arg1[%c8_36, %c0_37] : memref<27x128xf32, #tpu.memory_space<vmem>>, vector<1x128xf32>
    %53 = vector.shape_cast %52 : vector<1x128xf32> to vector<128xf32>
    %54 = arith.mulf %53, %17 : vector<128xf32>
    %55 = arith.addf %51, %54 : vector<128xf32>
    %cst = arith.constant 0.000000e+00 : f32
    %56 = vector.broadcast %cst : f32 to vector<128xf32>
    %57 = arith.maximumf %55, %56 : vector<128xf32>
    %c0_38 = arith.constant 0 : index
    %c0_39 = arith.constant 0 : index
    %c0_40 = arith.constant 0 : index
    %58 = vector.load %arg4[%c0_38, %c0_39, %c0_40] : memref<1x3x128xf32, #tpu.memory_space<vmem>>, vector<1x1x128xf32>
    %59 = vector.shape_cast %58 : vector<1x1x128xf32> to vector<128xf32>
    %60 = vector.shape_cast %57 : vector<128xf32> to vector<1x1x128xf32>
    tpu.vector_store %arg4[%c0_38, %c0_39, %c0_40], %60 {strides = array<i32>} : memref<1x3x128xf32, #tpu.memory_space<vmem>>, vector<1x1x128xf32>,
    %c1_41 = arith.constant 1 : index
    %c0_42 = arith.constant 0 : index
    %61 = vector.load %arg2[%c1_41, %c0_42] : memref<3x128xf32, #tpu.memory_space<vmem>>, vector<1x128xf32>
    %62 = vector.shape_cast %61 : vector<1x128xf32> to vector<128xf32>
    %c9 = arith.constant 9 : index
    %c0_43 = arith.constant 0 : index
    %63 = vector.load %arg1[%c9, %c0_43] : memref<27x128xf32, #tpu.memory_space<vmem>>, vector<1x128xf32>
    %64 = vector.shape_cast %63 : vector<1x128xf32> to vector<128xf32>
    %65 = arith.mulf %64, %1 : vector<128xf32>
    %66 = arith.addf %62, %65 : vector<128xf32>
    %c10 = arith.constant 10 : index
    %c0_44 = arith.constant 0 : index
    %67 = vector.load %arg1[%c10, %c0_44] : memref<27x128xf32, #tpu.memory_space<vmem>>, vector<1x128xf32>
    %68 = vector.shape_cast %67 : vector<1x128xf32> to vector<128xf32>
    %69 = arith.mulf %68, %3 : vector<128xf32>
    %70 = arith.addf %66, %69 : vector<128xf32>
    %c11 = arith.constant 11 : index
    %c0_45 = arith.constant 0 : index
    %71 = vector.load %arg1[%c11, %c0_45] : memref<27x128xf32, #tpu.memory_space<vmem>>, vector<1x128xf32>
    %72 = vector.shape_cast %71 : vector<1x128xf32> to vector<128xf32>
    %73 = arith.mulf %72, %5 : vector<128xf32>
    %74 = arith.addf %70, %73 : vector<128xf32>
    %c12 = arith.constant 12 : index
    %c0_46 = arith.constant 0 : index
    %75 = vector.load %arg1[%c12, %c0_46] : memref<27x128xf32, #tpu.memory_space<vmem>>, vector<1x128xf32>
    %76 = vector.shape_cast %75 : vector<1x128xf32> to vector<128xf32>
    %77 = arith.mulf %76, %7 : vector<128xf32>
    %78 = arith.addf %74, %77 : vector<128xf32>
    %c13 = arith.constant 13 : index
    %c0_47 = arith.constant 0 : index
    %79 = vector.load %arg1[%c13, %c0_47] : memref<27x128xf32, #tpu.memory_space<vmem>>, vector<1x128xf32>
    %80 = vector.shape_cast %79 : vector<1x128xf32> to vector<128xf32>
    %81 = arith.mulf %80, %9 : vector<128xf32>
    %82 = arith.addf %78, %81 : vector<128xf32>
    %c14 = arith.constant 14 : index
    %c0_48 = arith.constant 0 : index
    %83 = vector.load %arg1[%c14, %c0_48] : memref<27x128xf32, #tpu.memory_space<vmem>>, vector<1x128xf32>
    %84 = vector.shape_cast %83 : vector<1x128xf32> to vector<128xf32>
    %85 = arith.mulf %84, %11 : vector<128xf32>
    %86 = arith.addf %82, %85 : vector<128xf32>
    %c15 = arith.constant 15 : index
    %c0_49 = arith.constant 0 : index
    %87 = vector.load %arg1[%c15, %c0_49] : memref<27x128xf32, #tpu.memory_space<vmem>>, vector<1x128xf32>
    %88 = vector.shape_cast %87 : vector<1x128xf32> to vector<128xf32>
    %89 = arith.mulf %88, %13 : vector<128xf32>
    %90 = arith.addf %86, %89 : vector<128xf32>
    %c16 = arith.constant 16 : index
    %c0_50 = arith.constant 0 : index
    %91 = vector.load %arg1[%c16, %c0_50] : memref<27x128xf32, #tpu.memory_space<vmem>>, vector<1x128xf32>
    %92 = vector.shape_cast %91 : vector<1x128xf32> to vector<128xf32>
    %93 = arith.mulf %92, %15 : vector<128xf32>
    %94 = arith.addf %90, %93 : vector<128xf32>
    %c17 = arith.constant 17 : index
    %c0_51 = arith.constant 0 : index
    %95 = vector.load %arg1[%c17, %c0_51] : memref<27x128xf32, #tpu.memory_space<vmem>>, vector<1x128xf32>
    %96 = vector.shape_cast %95 : vector<1x128xf32> to vector<128xf32>
    %97 = arith.mulf %96, %17 : vector<128xf32>
    %98 = arith.addf %94, %97 : vector<128xf32>
    %cst_52 = arith.constant 0.000000e+00 : f32
    %99 = vector.broadcast %cst_52 : f32 to vector<128xf32>
    %100 = arith.maximumf %98, %99 : vector<128xf32>
    %c0_53 = arith.constant 0 : index
    %c1_54 = arith.constant 1 : index
    %c0_55 = arith.constant 0 : index
    %101 = vector.load %arg4[%c0_53, %c1_54, %c0_55] : memref<1x3x128xf32, #tpu.memory_space<vmem>>, vector<1x1x128xf32>
    %102 = vector.shape_cast %101 : vector<1x1x128xf32> to vector<128xf32>
    %103 = vector.shape_cast %100 : vector<128xf32> to vector<1x1x128xf32>
    tpu.vector_store %arg4[%c0_53, %c1_54, %c0_55], %103 {strides = array<i32>} : memref<1x3x128xf32, #tpu.memory_space<vmem>>, vector<1x1x128xf32>,
    %c2_56 = arith.constant 2 : index
    %c0_57 = arith.constant 0 : index
    %104 = vector.load %arg2[%c2_56, %c0_57] : memref<3x128xf32, #tpu.memory_space<vmem>>, vector<1x128xf32>
    %105 = vector.shape_cast %104 : vector<1x128xf32> to vector<128xf32>
    %c18 = arith.constant 18 : index
    %c0_58 = arith.constant 0 : index
    %106 = vector.load %arg1[%c18, %c0_58] : memref<27x128xf32, #tpu.memory_space<vmem>>, vector<1x128xf32>
    %107 = vector.shape_cast %106 : vector<1x128xf32> to vector<128xf32>
    %108 = arith.mulf %107, %1 : vector<128xf32>
    %109 = arith.addf %105, %108 : vector<128xf32>
    %c19 = arith.constant 19 : index
    %c0_59 = arith.constant 0 : index
    %110 = vector.load %arg1[%c19, %c0_59] : memref<27x128xf32, #tpu.memory_space<vmem>>, vector<1x128xf32>
    %111 = vector.shape_cast %110 : vector<1x128xf32> to vector<128xf32>
    %112 = arith.mulf %111, %3 : vector<128xf32>
    %113 = arith.addf %109, %112 : vector<128xf32>
    %c20 = arith.constant 20 : index
    %c0_60 = arith.constant 0 : index
    %114 = vector.load %arg1[%c20, %c0_60] : memref<27x128xf32, #tpu.memory_space<vmem>>, vector<1x128xf32>
    %115 = vector.shape_cast %114 : vector<1x128xf32> to vector<128xf32>
    %116 = arith.mulf %115, %5 : vector<128xf32>
    %117 = arith.addf %113, %116 : vector<128xf32>
    %c21 = arith.constant 21 : index
    %c0_61 = arith.constant 0 : index
    %118 = vector.load %arg1[%c21, %c0_61] : memref<27x128xf32, #tpu.memory_space<vmem>>, vector<1x128xf32>
    %119 = vector.shape_cast %118 : vector<1x128xf32> to vector<128xf32>
    %120 = arith.mulf %119, %7 : vector<128xf32>
    %121 = arith.addf %117, %120 : vector<128xf32>
    %c22 = arith.constant 22 : index
    %c0_62 = arith.constant 0 : index
    %122 = vector.load %arg1[%c22, %c0_62] : memref<27x128xf32, #tpu.memory_space<vmem>>, vector<1x128xf32>
    %123 = vector.shape_cast %122 : vector<1x128xf32> to vector<128xf32>
    %124 = arith.mulf %123, %9 : vector<128xf32>
    %125 = arith.addf %121, %124 : vector<128xf32>
    %c23 = arith.constant 23 : index
    %c0_63 = arith.constant 0 : index
    %126 = vector.load %arg1[%c23, %c0_63] : memref<27x128xf32, #tpu.memory_space<vmem>>, vector<1x128xf32>
    %127 = vector.shape_cast %126 : vector<1x128xf32> to vector<128xf32>
    %128 = arith.mulf %127, %11 : vector<128xf32>
    %129 = arith.addf %125, %128 : vector<128xf32>
    %c24 = arith.constant 24 : index
    %c0_64 = arith.constant 0 : index
    %130 = vector.load %arg1[%c24, %c0_64] : memref<27x128xf32, #tpu.memory_space<vmem>>, vector<1x128xf32>
    %131 = vector.shape_cast %130 : vector<1x128xf32> to vector<128xf32>
    %132 = arith.mulf %131, %13 : vector<128xf32>
    %133 = arith.addf %129, %132 : vector<128xf32>
    %c25 = arith.constant 25 : index
    %c0_65 = arith.constant 0 : index
    %134 = vector.load %arg1[%c25, %c0_65] : memref<27x128xf32, #tpu.memory_space<vmem>>, vector<1x128xf32>
    %135 = vector.shape_cast %134 : vector<1x128xf32> to vector<128xf32>
    %136 = arith.mulf %135, %15 : vector<128xf32>
    %137 = arith.addf %133, %136 : vector<128xf32>
    %c26 = arith.constant 26 : index
    %c0_66 = arith.constant 0 : index
    %138 = vector.load %arg1[%c26, %c0_66] : memref<27x128xf32, #tpu.memory_space<vmem>>, vector<1x128xf32>
    %139 = vector.shape_cast %138 : vector<1x128xf32> to vector<128xf32>
    %140 = arith.mulf %139, %17 : vector<128xf32>
    %141 = arith.addf %137, %140 : vector<128xf32>
    %cst_67 = arith.constant 0.000000e+00 : f32
    %142 = vector.broadcast %cst_67 : f32 to vector<128xf32>
    %143 = arith.maximumf %141, %142 : vector<128xf32>
    %c0_68 = arith.constant 0 : index
    %c2_69 = arith.constant 2 : index
    %c0_70 = arith.constant 0 : index
    %144 = vector.load %arg4[%c0_68, %c2_69, %c0_70] : memref<1x3x128xf32, #tpu.memory_space<vmem>>, vector<1x1x128xf32>
    %145 = vector.shape_cast %144 : vector<1x1x128xf32> to vector<128xf32>
    %146 = vector.shape_cast %143 : vector<128xf32> to vector<1x1x128xf32>
    tpu.vector_store %arg4[%c0_68, %c2_69, %c0_70], %146 {strides = array<i32>} : memref<1x3x128xf32, #tpu.memory_space<vmem>>, vector<1x1x128xf32>,
    return
  }
  func.func @transform_0(%arg0: i32) -> (i32, i32) {
    %c0_i32 = arith.constant 0 : i32
    %c0_i32_0 = arith.constant 0 : i32
    %c0_i32_1 = arith.constant 0 : i32
    return %c0_i32, %c0_i32_0 : i32, i32
  }
  func.func @transform_1(%arg0: i32) -> (i32, i32) {
    %c0_i32 = arith.constant 0 : i32
    %c0_i32_0 = arith.constant 0 : i32
    %c0_i32_1 = arith.constant 0 : i32
    return %c0_i32, %c0_i32_0 : i32, i32
  }
  func.func @transform_2(%arg0: i32) -> (i32, i32, i32) {
    %c0_i32 = arith.constant 0 : i32
    %c0_i32_0 = arith.constant 0 : i32
    %c0_i32_1 = arith.constant 0 : i32
    return %arg0, %c0_i32, %c0_i32_0 : i32, i32, i32
  }
  func.func @transform_3(%arg0: i32) -> (i32, i32, i32) {
    %c0_i32 = arith.constant 0 : i32
    %c0_i32_0 = arith.constant 0 : i32
    %c0_i32_1 = arith.constant 0 : i32
    return %arg0, %c0_i32, %c0_i32_0 : i32, i32, i32
  }
}

</mosaic_0001>

<llo_original>
// kernel: tpu_custom_call.1
$region0: #{tpu_custom_call.1}
  #allocation0 [shape = 'u32[]', space=smem, size = 0x4, offset = 0x4, fixed_abs, tag = 'smem constant byte address 0x4 - core index']
  #allocation1 [shape = 'u32[144,128]{1,0:T(1,128)}', space=vmem, size = 0x12000, scoped, tag = 'internal scratch']
  %s0 = inlined_call_operand.hbm [shape: f32[27,128], index: 0, kind: input, shape index: {}]
  %s1 = inlined_call_operand.vmem [shape: f32[3,128], index: 1, kind: input, shape index: {}]
  %s2 = inlined_call_operand.vmem [shape: f32[1,9,128], index: 2, kind: input, shape index: {}]
  %s3 = inlined_call_operand.vmem [shape: f32[1,3,128], index: 3, kind: output, shape index: {}]
  %s4 = sld [smem:[#allocation0]]
  $region26: #{tpu_custom_call.1} parent=0
    _
  %s6 = ssub.s32 1, %s4
  %s7 = scalar_select 0, %s6, %s4
  $region1: #{tpu_custom_call.1} parent=0
    #allocation2 [shape = 'u8[16384]{0}', space=vmem, size = 0x4000, scoped, tag = 'input window, operand 0, single buffered']
    #allocation3 [shape = 's32[1]{0}', space=sflag, size = 0x4, scoped, tag = 'scoped memory for tpu_custom_call.1']
    %8 = vsyncpa [#allocation3], 0
    // Predicated region
    $region2: #{tpu_custom_call.1} parent=1 // pred_check
      _
    $region3: #{tpu_custom_call.1} parent=1 // pred_check_branch
      %10 = sbr.rel (0) target = $region5
    $region4: #{tpu_custom_call.1} parent=1 // pred_region
      %s12 = ssub.s32 512, 512
      %13 = vsyncadd [#allocation3], %s12
      %s14 = sshll.u32 [#allocation2], 4
      %s15 = int_to_ptr.vmem [resolvable:$true] %s14
      %20 = dma.hbm_to_vmem [thread:$0]  %s0, 512, %s15, [#allocation3], 128, 128, 8
    $region5: #{tpu_custom_call.1} parent=1 // pred_fallthru
      _
    // Predicated region
    $region6: #{tpu_custom_call.1} parent=1 // pred_check
      _
    $region7: #{tpu_custom_call.1} parent=1 // pred_check_branch
      %22 = sbr.rel (0) target = $region9
    $region8: #{tpu_custom_call.1} parent=1 // pred_region
      _
    $region9: #{tpu_custom_call.1} parent=1 // pred_fallthru
      _
    // Predicated region
    $region10: #{tpu_custom_call.1} parent=1 // pred_check
      _
    $region11: #{tpu_custom_call.1} parent=1 // pred_check_branch
      %24 = sbr.rel (0) target = $region13
    $region12: #{tpu_custom_call.1} parent=1 // pred_region
      _
    $region13: #{tpu_custom_call.1} parent=1 // pred_fallthru
      _
    // Predicated region
    $region14: #{tpu_custom_call.1} parent=1 // pred_check
      _
    $region15: #{tpu_custom_call.1} parent=1 // pred_check_branch
      %26 = sbr.rel (0) target = $region17
    $region16: #{tpu_custom_call.1} parent=1 // pred_region
      %27 = dma.done [#allocation3], 512
    $region17: #{tpu_custom_call.1} parent=1 // pred_fallthru
      _
    %v28 = vld [vmem:[%s2] sm:$0x1]
    %v29 = vld [vmem:[%s2 + $0x1] sm:$0x1]
    %v30 = vld [vmem:[%s2 + $0x2] sm:$0x1]
    %v31 = vld [vmem:[%s2 + $0x3] sm:$0x1]
    %v32 = vld [vmem:[%s2 + $0x4] sm:$0x1]
    %v33 = vld [vmem:[%s2 + $0x5] sm:$0x1]
    %v34 = vld [vmem:[%s2 + $0x6] sm:$0x1]
    %v35 = vld [vmem:[%s2 + $0x7] sm:$0x1]
    %v36 = vld [vmem:[%s2 + $0x8] sm:$0x1]
    %v37 = vld [vmem:[%s1] sm:$0x1]
    %v38 = vld [vmem:[#allocation2] sm:$0x1]
    %v39 = vmul.f32 %v38, %v28
    %v40 = vadd.f32 %v37, %v39
    %v41 = vld [vmem:[#allocation2 + $0x1] sm:$0x1]
    %v42 = vmul.f32 %v41, %v29
    %v43 = vadd.f32 %v40, %v42
    %v44 = vld [vmem:[#allocation2 + $0x2] sm:$0x1]
    %v45 = vmul.f32 %v44, %v30
    %v46 = vadd.f32 %v43, %v45
    %v47 = vld [vmem:[#allocation2 + $0x3] sm:$0x1]
    %v48 = vmul.f32 %v47, %v31
    %v49 = vadd.f32 %v46, %v48
    %v50 = vld [vmem:[#allocation2 + $0x4] sm:$0x1]
    %v51 = vmul.f32 %v50, %v32
    %v52 = vadd.f32 %v49, %v51
    %v53 = vld [vmem:[#allocation2 + $0x5] sm:$0x1]
    %v54 = vmul.f32 %v53, %v33
    %v55 = vadd.f32 %v52, %v54
    %v56 = vld [vmem:[#allocation2 + $0x6] sm:$0x1]
    %v57 = vmul.f32 %v56, %v34
    %v58 = vadd.f32 %v55, %v57
    %v59 = vld [vmem:[#allocation2 + $0x7] sm:$0x1]
    %v60 = vmul.f32 %v59, %v35
    %v61 = vadd.f32 %v58, %v60
    %v62 = vld [vmem:[#allocation2 + $0x8] sm:$0x1]
    %v63 = vmul.f32 %v62, %v36
    %v64 = vadd.f32 %v61, %v63
    %v65 = vmax.f32 %v64, 0.0
    %66 = vst [vmem:[%s3] sm:$0x1] %v65
    %v67 = vld [vmem:[%s1 + $0x1] sm:$0x1]
    %v68 = vld [vmem:[#allocation2 + $0x9] sm:$0x1]
    %v69 = vmul.f32 %v68, %v28
    %v70 = vadd.f32 %v67, %v69
    %v71 = vld [vmem:[#allocation2 + $0xa] sm:$0x1]
    %v72 = vmul.f32 %v71, %v29
    %v73 = vadd.f32 %v70, %v72
    %v74 = vld [vmem:[#allocation2 + $0xb] sm:$0x1]
    %v75 = vmul.f32 %v74, %v30
    %v76 = vadd.f32 %v73, %v75
    %v77 = vld [vmem:[#allocation2 + $0xc] sm:$0x1]
    %v78 = vmul.f32 %v77, %v31
    %v79 = vadd.f32 %v76, %v78
    %v80 = vld [vmem:[#allocation2 + $0xd] sm:$0x1]
    %v81 = vmul.f32 %v80, %v32
    %v82 = vadd.f32 %v79, %v81
    %v83 = vld [vmem:[#allocation2 + $0xe] sm:$0x1]
    %v84 = vmul.f32 %v83, %v33
    %v85 = vadd.f32 %v82, %v84
    %v86 = vld [vmem:[#allocation2 + $0xf] sm:$0x1]
    %v87 = vmul.f32 %v86, %v34
    %v88 = vadd.f32 %v85, %v87
    %v89 = vld [vmem:[#allocation2 + $0x10] sm:$0x1]
    %v90 = vmul.f32 %v89, %v35
    %v91 = vadd.f32 %v88, %v90
    %v92 = vld [vmem:[#allocation2 + $0x11] sm:$0x1]
    %v93 = vmul.f32 %v92, %v36
    %v94 = vadd.f32 %v91, %v93
    %v95 = vmax.f32 %v94, 0.0
    %96 = vst [vmem:[%s3 + $0x1] sm:$0x1] %v95
    %v97 = vld [vmem:[%s1 + $0x2] sm:$0x1]
    %v98 = vld [vmem:[#allocation2 + $0x12] sm:$0x1]
    %v99 = vmul.f32 %v98, %v28
    %v100 = vadd.f32 %v97, %v99
    %v101 = vld [vmem:[#allocation2 + $0x13] sm:$0x1]
    %v102 = vmul.f32 %v101, %v29
    %v103 = vadd.f32 %v100, %v102
    %v104 = vld [vmem:[#allocation2 + $0x14] sm:$0x1]
    %v105 = vmul.f32 %v104, %v30
    %v106 = vadd.f32 %v103, %v105
    %v107 = vld [vmem:[#allocation2 + $0x15] sm:$0x1]
    %v108 = vmul.f32 %v107, %v31
    %v109 = vadd.f32 %v106, %v108
    %v110 = vld [vmem:[#allocation2 + $0x16] sm:$0x1]
    %v111 = vmul.f32 %v110, %v32
    %v112 = vadd.f32 %v109, %v111
    %v113 = vld [vmem:[#allocation2 + $0x17] sm:$0x1]
    %v114 = vmul.f32 %v113, %v33
    %v115 = vadd.f32 %v112, %v114
    %v116 = vld [vmem:[#allocation2 + $0x18] sm:$0x1]
    %v117 = vmul.f32 %v116, %v34
    %v118 = vadd.f32 %v115, %v117
    %v119 = vld [vmem:[#allocation2 + $0x19] sm:$0x1]
    %v120 = vmul.f32 %v119, %v35
    %v121 = vadd.f32 %v118, %v120
    %v122 = vld [vmem:[#allocation2 + $0x1a] sm:$0x1]
    %v123 = vmul.f32 %v122, %v36
    %v124 = vadd.f32 %v121, %v123
    %v125 = vmax.f32 %v124, 0.0
    %126 = vst [vmem:[%s3 + $0x2] sm:$0x1] %v125
    // Predicated region
    $region18: #{tpu_custom_call.1} parent=1 // pred_check
      _
    $region19: #{tpu_custom_call.1} parent=1 // pred_check_branch
      %128 = sbr.rel (0) target = $region21
    $region20: #{tpu_custom_call.1} parent=1 // pred_region
      _
    $region21: #{tpu_custom_call.1} parent=1 // pred_fallthru
      _
    // Predicated region
    $region22: #{tpu_custom_call.1} parent=1 // pred_check
      _
    $region23: #{tpu_custom_call.1} parent=1 // pred_check_branch
      %130 = sbr.rel (0) target = $region25
    $region24: #{tpu_custom_call.1} parent=1 // pred_region
      _
    $region25: #{tpu_custom_call.1} parent=1 // pred_fallthru
      _
    %131 = vsyncpa [#allocation3], 1

</llo_original>
